<compile_context>
chip_gen: v7x
topology: tpu7x:2x2x1
jax: 0.10.0
libtpu: 0.0.40
codegen_flags: <defaults>
</compile_context>

<pallas_src>
import math
import functools

import numpy as np
import jax
import jax.numpy as jnp
from jax.experimental import pallas as pl
from jax.experimental.pallas import tpu as pltpu


# ---------------------------------------------------------------------------
# Synthetic synapse construction (setup glue mirroring the module's __init__
# helpers; deterministic numpy rng, NOT part of the forward hot path).
# ---------------------------------------------------------------------------
def brain_region(neuron_counts):
    region = []
    start = 0
    end = 0
    for n in neuron_counts:
        end += int(n)
        region.append([start, end])
        start = end
    return np.array(region, dtype=np.int64)


def syn_within_region(syn_num, region, rng):
    chunks = []
    for (lo, hi) in region:
        size = (hi - lo) * syn_num
        chunks.append(rng.integers(lo, hi, size=(size, 2)))
    return np.concatenate(chunks, axis=0)


def syn_cross_region(weight_matrix, region, rng):
    chunks = []
    R = len(weight_matrix)
    for i in range(R):
        for j in range(R):
            w = int(weight_matrix[i][j])
            if w < 10:
                continue
            pre = rng.integers(region[j][0], region[j][1], size=(w, 1))
            post = rng.integers(region[i][0], region[i][1], size=(w, 1))
            chunks.append(np.concatenate((post, pre), axis=1))
    return np.concatenate(chunks, axis=0)


# ---------------------------------------------------------------------------
# Helpers
# ---------------------------------------------------------------------------
def _round_up(x, m):
    return -(-x // m) * m


def _choose_out_tile(n_pad):
    """Output-tile width: largest of {1024, 512, 256, 128} dividing n_pad such
    that the (n_pad, t_out) bf16 W slab stays <= ~8 MiB per pipeline buffer and
    the tile count is >= 2 and even (both v7x TensorCores get work)."""
    for t in (1024, 512, 256, 128):
        if n_pad % t:
            continue
        g = n_pad // t
        if n_pad * t * 2 > 8 * 1024 * 1024:
            continue
        if n_pad >= 256 and (g < 2 or g % 2 == 1):
            continue
        return t
    return 128


def _sublane_bytes(cols, itemsize, rows=1):
    # A (rows, cols) VMEM buffer pads its second-minor dim up to a multiple of 8.
    return _round_up(max(rows, 1), 8) * cols * itemsize


# ---------------------------------------------------------------------------
# One-time weight preparation (hoisted out of the hot path).
# ---------------------------------------------------------------------------
def prepare_syn_weights(w_dense):
    """Pad, transpose, cast to bf16 (exact for these small-integer sums), and
    pre-block W so each W DMA reads one contiguous (n_pad, t_out) slab.

    Returns an array of shape (g_out, n_pad, t_out), bf16, where
    result[i, pre, c] == W[i * t_out + c, pre]  (i.e. W^T column-blocked)."""
    w = jnp.asarray(w_dense, jnp.float32)
    n = w.shape[0]
    n_pad = _round_up(n, 128)
    t_out = _choose_out_tile(n_pad)
    g_out = n_pad // t_out
    w_t = jnp.zeros((n_pad, n_pad), jnp.float32).at[:n, :n].set(w.T)
    w_blocked = w_t.reshape(n_pad, g_out, t_out).transpose(1, 0, 2)
    return w_blocked.astype(jnp.bfloat16)


# ---------------------------------------------------------------------------
# Pallas kernel: fused time steps with W resident in VMEM.
# Grid = (output_tiles [parallel], num_steps [arbitrary, carried state]).
# ---------------------------------------------------------------------------
def _syn_fused_kernel(iback0_ref, s0f_ref, r0f_ref, s0t_ref, r0t_ref,
                      noise_ref, spikef_ref, spiket_ref, wt_ref,
                      i_out_ref, iback_out_ref, s_out_ref, r_out_ref,
                      s_st, r_st,
                      *, dt_over_tau, sqrt_coeff, sig, mu,
                      lamda_r, lamda_d, dt, inv_tao_d):
    t = pl.program_id(1)   # time step (sequential, carried state)

    @pl.when(t == 0)
    def _():
        # Per-output-tile state lives in the resident output buffers; the full
        # presynaptic state (matvec LHS) lives in scratch.  Re-initialized
        # whenever the parallel output-tile index changes, which is also
        # correct under v7x megacore (each core re-inits its own buffers).
        iback_out_ref[...] = iback0_ref[...]
        s_out_ref[...] = s0t_ref[...]
        r_out_ref[...] = r0t_ref[...]
        s_st[...] = s0f_ref[...]
        r_st[...] = r0f_ref[...]

    # ---- background current / effective drive (this output tile) ----------
    noise_t = noise_ref[0]                                   # (1, t_out)
    iback_prev = iback_out_ref[...]
    iback_new = iback_prev + dt_over_tau * (noise_t - iback_prev)
    ieff = iback_new / sqrt_coeff * sig + mu
    iback_out_ref[...] = iback_new

    # ---- full presynaptic recurrence (matvec LHS), O(N) VPU work -----------
    spike_full = spikef_ref[0]                               # (1, n_pad)
    s_prev = s_st[...]
    r_prev = r_st[...]
    s_new = s_prev + lamda_r * (-s_prev + inv_tao_d * spike_full)
    r_new = r_prev - lamda_d * r_prev + dt * s_new
    s_st[...] = s_new
    r_st[...] = r_new

    # ---- per-output-tile recurrence (final-state outputs), O(t_out) --------
    spike_t = spiket_ref[0]                                  # (1, t_out)
    s_tp = s_out_ref[...]
    r_tp = r_out_ref[...]
    s_t_new = s_tp + lamda_r * (-s_tp + inv_tao_d * spike_t)
    r_t_new = r_tp - lamda_d * r_tp + dt * s_t_new
    s_out_ref[...] = s_t_new
    r_out_ref[...] = r_t_new

    # ---- matvec on the MXU --------------------------------------------------
    # bf16 hi/lo split of r' restores near-f32 accuracy; the second MXU pass
    # is free (the MXU is nearly idle).  W in bf16 is exact (small integers).
    wt = wt_ref[0]                                           # (n_pad, t_out)
    r_hi = r_new.astype(jnp.bfloat16)
    r_lo = (r_new - r_hi.astype(jnp.float32)).astype(jnp.bfloat16)
    acc = jnp.dot(r_hi, wt, preferred_element_type=jnp.float32)
    acc = acc + jnp.dot(r_lo, wt, preferred_element_type=jnp.float32)
    i_out_ref[0] = acc + ieff


# ---------------------------------------------------------------------------
# Wrapper: fused multi-step forward.
# ---------------------------------------------------------------------------
@functools.partial(jax.jit, static_argnames=(
    "dt_over_tau", "sqrt_coeff", "sig", "mu", "lamda_r", "lamda_d", "dt", "tao_d"))
def syn_forward_fused(w_blocked, iback0, s0, r0, noise, spike, *,
                      dt_over_tau, sqrt_coeff, sig, mu,
                      lamda_r, lamda_d, dt, tao_d):
    """Runs num_steps fused Syn.forward steps with W resident in VMEM.

    w_blocked: (g_out, n_pad, t_out) bf16 from prepare_syn_weights (one-time setup).
    iback0, s0, r0: (1, N) f32 initial state.
    noise, spike:   (num_steps, N) f32 per-step inputs.
    Returns: I (num_steps, N) f32 and final (Iback, s, r), each (1, N) f32.
    """
    g_out, n_pad, t_out = w_blocked.shape
    num_steps, n = noise.shape

    def pad_row(v):
        v = jnp.asarray(v, jnp.float32).reshape(1, -1)
        return jnp.zeros((1, n_pad), jnp.float32).at[:, :n].set(v)

    def pad_steps(v):
        v = jnp.asarray(v, jnp.float32).reshape(num_steps, 1, -1)
        return jnp.zeros((num_steps, 1, n_pad), jnp.float32).at[:, :, :n].set(v)

    iback_p = pad_row(iback0)
    s_p = pad_row(s0)
    r_p = pad_row(r0)
    noise_p = pad_steps(noise)
    spike_p = pad_steps(spike)

    kernel = functools.partial(
        _syn_fused_kernel,
        dt_over_tau=float(dt_over_tau), sqrt_coeff=float(sqrt_coeff),
        sig=float(sig), mu=float(mu), lamda_r=float(lamda_r),
        lamda_d=float(lamda_d), dt=float(dt), inv_tao_d=float(1.0 / tao_d))

    # ---- BlockSpecs ---------------------------------------------------------
    tile_spec = pl.BlockSpec((1, t_out), lambda i, t: (0, i))          # per-output-tile row
    full_spec = pl.BlockSpec((1, n_pad), lambda i, t: (0, 0))          # resident full row
    noise_spec = pl.BlockSpec((1, 1, t_out), lambda i, t: (t, 0, i))   # per step / tile
    spike_full_spec = pl.BlockSpec((1, 1, n_pad), lambda i, t: (t, 0, 0))
    spike_tile_spec = pl.BlockSpec((1, 1, t_out), lambda i, t: (t, 0, i))
    wt_spec = pl.BlockSpec((1, n_pad, t_out), lambda i, t: (i, 0, 0))  # resident over t
    i_out_spec = pl.BlockSpec((1, 1, t_out), lambda i, t: (t, 0, i))
    state_out_spec = pl.BlockSpec((1, t_out), lambda i, t: (0, i))

    out_shape = (
        jax.ShapeDtypeStruct((num_steps, 1, n_pad), jnp.float32),   # I
        jax.ShapeDtypeStruct((1, n_pad), jnp.float32),              # Iback final
        jax.ShapeDtypeStruct((1, n_pad), jnp.float32),              # s final
        jax.ShapeDtypeStruct((1, n_pad), jnp.float32),              # r final
    )

    # ---- VMEM budget (accounts for sublane padding of (1, x) buffers) ------
    est_vmem = (
        2 * n_pad * t_out * 2                      # W slab (bf16), double-buffered
        + 2 * _sublane_bytes(t_out, 4)             # noise tile
        + 2 * _sublane_bytes(n_pad, 4)             # spike full row
        + 2 * _sublane_bytes(t_out, 4)             # spike tile
        + 2 * 2 * _sublane_bytes(n_pad, 4)         # s0 / r0 full (resident)
        + 3 * 2 * _sublane_bytes(t_out, 4)         # iback0 / s0 / r0 tiles
        + 4 * 2 * _sublane_bytes(t_out, 4)         # 4 outputs
        + 2 * _sublane_bytes(n_pad, 4)             # s / r state scratch
    )
    vmem_limit = int(min(max(int(est_vmem * 1.3) + (1 << 20), 32 << 20), 56 << 20))

    cost = pl.CostEstimate(
        flops=int(4 * num_steps * n_pad * n_pad),
        transcendentals=0,
        bytes_accessed=int(n_pad * n_pad * 2                 # W streamed once
                           + num_steps * n_pad * 4           # noise
                           + g_out * num_steps * n_pad * 4   # spike (per tile)
                           + num_steps * n_pad * 4           # I out
                           + 8 * n_pad * 4))

    outs = pl.pallas_call(
        kernel,
        out_shape=out_shape,
        grid_spec=pltpu.PrefetchScalarGridSpec(
            num_scalar_prefetch=0,
            grid=(g_out, num_steps),
            in_specs=[tile_spec,         # iback0 (per tile)
                      full_spec,         # s0 (full, matvec-LHS state init)
                      full_spec,         # r0 (full)
                      tile_spec,         # s0 (per tile, final-state carrier init)
                      tile_spec,         # r0 (per tile)
                      noise_spec,        # noise[t] (per tile)
                      spike_full_spec,   # spike[t] (full row)
                      spike_tile_spec,   # spike[t] (per tile)
                      wt_spec],          # W slab (bf16, resident over t)
            out_specs=[i_out_spec, state_out_spec, state_out_spec, state_out_spec],
            scratch_shapes=[pltpu.VMEM((1, n_pad), jnp.float32),   # s state (full)
                            pltpu.VMEM((1, n_pad), jnp.float32)],  # r state (full)
        ),
        compiler_params=pltpu.CompilerParams(
            dimension_semantics=("parallel", "arbitrary"),
            vmem_limit_bytes=vmem_limit),
        cost_estimate=cost,
    )(iback_p, s_p, r_p, s_p, r_p, noise_p, spike_p, spike_p, w_blocked)

    I_all, iback_f, s_f, r_f = outs
    return (I_all[:, 0, :n], iback_f[:, :n], s_f[:, :n], r_f[:, :n])


# ---------------------------------------------------------------------------
# Driver
# ---------------------------------------------------------------------------
if __name__ == "__main__":
    # ---- synthetic network construction (deterministic) -------------------
    rng = np.random.default_rng(0)
    region_sizes = [32, 64, 64, 96]          # 4 brain regions -> N = 256 neurons
    N = int(sum(region_sizes))
    regions = brain_region(region_sizes)

    syn_1 = syn_within_region(10, regions, rng)
    weight_matrix = (rng.integers(0, 4, size=(4, 4)) * 10).astype(np.int64)
    syn_2 = syn_cross_region(weight_matrix, regions, rng)
    syn = np.concatenate((syn_1, syn_2), axis=0)              # (num_syn, 2) = [post, pre]
    weight = -np.ones(len(syn), dtype=np.float32)

    # Dense equivalent of torch.sparse_coo_tensor (duplicate indices sum).
    post = jnp.asarray(syn[:, 0], dtype=jnp.int32)
    pre = jnp.asarray(syn[:, 1], dtype=jnp.int32)
    W = jnp.zeros((N, N), dtype=jnp.float32).at[post, pre].add(jnp.asarray(weight))

    # One-time setup: pad + transpose + bf16 cast + contiguous pre-blocking.
    W_blocked = prepare_syn_weights(W)
    W_blocked = jax.block_until_ready(W_blocked)

    # ---- model hyperparameters (synthetic) ---------------------------------
    tao_d, tao_r, dt = 2.0, 0.5, 0.1
    lamda_d = dt / tao_d
    lamda_r = dt / tao_r
    dt_over_tau = 0.05
    sqrt_coeff = math.sqrt(2.0)
    sig, mu = 1.0, 0.5

    # ---- forward-pass inputs (deterministic) -------------------------------
    # TODO(synk): torch.randn inside forward is modeled as precomputed per-step noise.
    T = 8                                     # fused time steps per pallas_call
    key = jax.random.PRNGKey(0)
    k_noise, k_iback, k_spike = jax.random.split(key, 3)
    noise = jax.random.normal(k_noise, (T, N), dtype=jnp.float32)
    spike = (jax.random.uniform(k_spike, (T, N)) < 0.2).astype(jnp.float32)
    iback0 = jax.random.normal(k_iback, (1, N), dtype=jnp.float32) * 0.1
    s0 = jnp.zeros((1, N), dtype=jnp.float32)
    r0 = jnp.zeros((1, N), dtype=jnp.float32)

    # ---- run kernel ---------------------------------------------------------
    I_all, iback_f, s_f, r_f = syn_forward_fused(
        W_blocked, iback0, s0, r0, noise, spike,
        dt_over_tau=dt_over_tau, sqrt_coeff=sqrt_coeff, sig=sig, mu=mu,
        lamda_r=lamda_r, lamda_d=lamda_d, dt=dt, tao_d=tao_d)
    jax.block_until_ready((I_all, iback_f, s_f, r_f))

    # ---- pure-JAX reference (per-step loop, f32 end-to-end) -----------------
    ib = iback0
    ss = s0
    rr = r0
    I_ref_steps = []
    for t_step in range(T):
        ib = ib + dt_over_tau * (noise[t_step:t_step + 1] - ib)
        ieff = ib / sqrt_coeff * sig + mu
        ss = ss + lamda_r * (-ss + (1.0 / tao_d) * spike[t_step:t_step + 1])
        rr = rr - lamda_d * rr + dt * ss
        I_ref_steps.append((W @ rr[0])[None, :] + ieff)
    I_ref = jnp.concatenate(I_ref_steps, axis=0)

    # hi/lo bf16 split of r' + exact bf16 W -> near-f32 accuracy on I.
    np.testing.assert_allclose(np.asarray(I_all), np.asarray(I_ref), rtol=5e-4, atol=5e-4)
    np.testing.assert_allclose(np.asarray(iback_f), np.asarray(ib), rtol=1e-5, atol=1e-6)
    np.testing.assert_allclose(np.asarray(s_f), np.asarray(ss), rtol=1e-5, atol=1e-6)
    np.testing.assert_allclose(np.asarray(r_f), np.asarray(rr), rtol=1e-5, atol=1e-6)

    print("KERNEL_OK")
</pallas_src>

<mosaic_0001>
module attributes {stable_mosaic.version = 11 : i64} {
  func.func @_syn_fused_kernel(%arg0: i32, %arg1: i32, %arg2: memref<1x128xf32, #tpu.memory_space<vmem>>, %arg3: memref<1x256xf32, #tpu.memory_space<vmem>>, %arg4: memref<1x256xf32, #tpu.memory_space<vmem>>, %arg5: memref<1x128xf32, #tpu.memory_space<vmem>>, %arg6: memref<1x128xf32, #tpu.memory_space<vmem>>, %arg7: memref<1x1x128xf32, #tpu.memory_space<vmem>>, %arg8: memref<1x1x256xf32, #tpu.memory_space<vmem>>, %arg9: memref<1x1x128xf32, #tpu.memory_space<vmem>>, %arg10: memref<1x256x128xbf16, #tpu.memory_space<vmem>>, %arg11: memref<1x1x128xf32, #tpu.memory_space<vmem>>, %arg12: memref<1x128xf32, #tpu.memory_space<vmem>>, %arg13: memref<1x128xf32, #tpu.memory_space<vmem>>, %arg14: memref<1x128xf32, #tpu.memory_space<vmem>>, %arg15: memref<1x256xf32, #tpu.memory_space<vmem>>, %arg16: memref<1x256xf32, #tpu.memory_space<vmem>>) attributes {dimension_semantics = [#tpu.dimension_semantics<parallel>, #tpu.dimension_semantics<arbitrary>], iteration_bounds = array<i64: 2, 8>, scalar_prefetch = 0 : i64, scratch_operands = 2 : i64, tpu.core_type = #tpu.core_type<tc>, window_params = [{transform_indices = @transform_0, window_bounds = array<i64: 1, 128>}, {pipeline_mode = #tpu.pipeline_mode<synchronous>, transform_indices = @transform_1, window_bounds = array<i64: 1, 256>}, {pipeline_mode = #tpu.pipeline_mode<synchronous>, transform_indices = @transform_2, window_bounds = array<i64: 1, 256>}, {transform_indices = @transform_3, window_bounds = array<i64: 1, 128>}, {transform_indices = @transform_4, window_bounds = array<i64: 1, 128>}, {transform_indices = @transform_5, window_bounds = array<i64: 1, 1, 128>}, {transform_indices = @transform_6, window_bounds = array<i64: 1, 1, 256>}, {transform_indices = @transform_7, window_bounds = array<i64: 1, 1, 128>}, {transform_indices = @transform_8, window_bounds = array<i64: 1, 256, 128>}, {transform_indices = @transform_9, window_bounds = array<i64: 1, 1, 128>}, {transform_indices = @transform_10, window_bounds = array<i64: 1, 128>}, {transform_indices = @transform_11, window_bounds = array<i64: 1, 128>}, {transform_indices = @transform_12, window_bounds = array<i64: 1, 128>}]} {
    %c0_i32 = arith.constant 0 : i32
    %0 = arith.cmpi eq, %arg1, %c0_i32 : i32
    %1 = arith.extui %0 : i1 to i32
    %c0_i32_0 = arith.constant 0 : i32
    %2 = arith.cmpi ne, %1, %c0_i32_0 : i32
    scf.if %2 {
      %c0_50 = arith.constant 0 : index
      %c0_51 = arith.constant 0 : index
      %70 = vector.load %arg2[%c0_50, %c0_51] : memref<1x128xf32, #tpu.memory_space<vmem>>, vector<1x128xf32>
      %c0_52 = arith.constant 0 : index
      %c0_53 = arith.constant 0 : index
      %71 = vector.load %arg12[%c0_52, %c0_53] : memref<1x128xf32, #tpu.memory_space<vmem>>, vector<1x128xf32>
      tpu.vector_store %arg12[%c0_52, %c0_53], %70 {strides = array<i32>} : memref<1x128xf32, #tpu.memory_space<vmem>>, vector<1x128xf32>,
      %c0_54 = arith.constant 0 : index
      %c0_55 = arith.constant 0 : index
      %72 = vector.load %arg5[%c0_54, %c0_55] : memref<1x128xf32, #tpu.memory_space<vmem>>, vector<1x128xf32>
      %c0_56 = arith.constant 0 : index
      %c0_57 = arith.constant 0 : index
      %73 = vector.load %arg13[%c0_56, %c0_57] : memref<1x128xf32, #tpu.memory_space<vmem>>, vector<1x128xf32>
      tpu.vector_store %arg13[%c0_56, %c0_57], %72 {strides = array<i32>} : memref<1x128xf32, #tpu.memory_space<vmem>>, vector<1x128xf32>,
      %c0_58 = arith.constant 0 : index
      %c0_59 = arith.constant 0 : index
      %74 = vector.load %arg6[%c0_58, %c0_59] : memref<1x128xf32, #tpu.memory_space<vmem>>, vector<1x128xf32>
      %c0_60 = arith.constant 0 : index
      %c0_61 = arith.constant 0 : index
      %75 = vector.load %arg14[%c0_60, %c0_61] : memref<1x128xf32, #tpu.memory_space<vmem>>, vector<1x128xf32>
      tpu.vector_store %arg14[%c0_60, %c0_61], %74 {strides = array<i32>} : memref<1x128xf32, #tpu.memory_space<vmem>>, vector<1x128xf32>,
      %c0_62 = arith.constant 0 : index
      %c0_63 = arith.constant 0 : index
      %76 = vector.load %arg3[%c0_62, %c0_63] : memref<1x256xf32, #tpu.memory_space<vmem>>, vector<1x256xf32>
      %c0_64 = arith.constant 0 : index
      %c0_65 = arith.constant 0 : index
      %77 = vector.load %arg15[%c0_64, %c0_65] : memref<1x256xf32, #tpu.memory_space<vmem>>, vector<1x256xf32>
      tpu.vector_store %arg15[%c0_64, %c0_65], %76 {strides = array<i32>} : memref<1x256xf32, #tpu.memory_space<vmem>>, vector<1x256xf32>,
      %c0_66 = arith.constant 0 : index
      %c0_67 = arith.constant 0 : index
      %78 = vector.load %arg4[%c0_66, %c0_67] : memref<1x256xf32, #tpu.memory_space<vmem>>, vector<1x256xf32>
      %c0_68 = arith.constant 0 : index
      %c0_69 = arith.constant 0 : index
      %79 = vector.load %arg16[%c0_68, %c0_69] : memref<1x256xf32, #tpu.memory_space<vmem>>, vector<1x256xf32>
      tpu.vector_store %arg16[%c0_68, %c0_69], %78 {strides = array<i32>} : memref<1x256xf32, #tpu.memory_space<vmem>>, vector<1x256xf32>,
    } else {
    }
    %c0 = arith.constant 0 : index
    %c0_1 = arith.constant 0 : index
    %c0_2 = arith.constant 0 : index
    %3 = vector.load %arg7[%c0, %c0_1, %c0_2] : memref<1x1x128xf32, #tpu.memory_space<vmem>>, vector<1x1x128xf32>
    %4 = vector.shape_cast %3 : vector<1x1x128xf32> to vector<1x128xf32>
    %c0_3 = arith.constant 0 : index
    %c0_4 = arith.constant 0 : index
    %5 = vector.load %arg12[%c0_3, %c0_4] : memref<1x128xf32, #tpu.memory_space<vmem>>, vector<1x128xf32>
    %6 = arith.subf %4, %5 : vector<1x128xf32>
    %cst = arith.constant 5.000000e-02 : f32
    %7 = vector.broadcast %cst : f32 to vector<1x128xf32>
    %8 = arith.mulf %7, %6 : vector<1x128xf32>
    %9 = arith.addf %5, %8 : vector<1x128xf32>
    %cst_5 = arith.constant 1.41421354 : f32
    %10 = vector.broadcast %cst_5 : f32 to vector<1x128xf32>
    %11 = arith.divf %9, %10 : vector<1x128xf32>
    %cst_6 = arith.constant 1.000000e+00 : f32
    %12 = vector.broadcast %cst_6 : f32 to vector<1x128xf32>
    %13 = arith.mulf %11, %12 : vector<1x128xf32>
    %cst_7 = arith.constant 5.000000e-01 : f32
    %14 = vector.broadcast %cst_7 : f32 to vector<1x128xf32>
    %15 = arith.addf %13, %14 : vector<1x128xf32>
    %c0_8 = arith.constant 0 : index
    %c0_9 = arith.constant 0 : index
    %16 = vector.load %arg12[%c0_8, %c0_9] : memref<1x128xf32, #tpu.memory_space<vmem>>, vector<1x128xf32>
    tpu.vector_store %arg12[%c0_8, %c0_9], %9 {strides = array<i32>} : memref<1x128xf32, #tpu.memory_space<vmem>>, vector<1x128xf32>,
    %c0_10 = arith.constant 0 : index
    %c0_11 = arith.constant 0 : index
    %c0_12 = arith.constant 0 : index
    %17 = vector.load %arg8[%c0_10, %c0_11, %c0_12] : memref<1x1x256xf32, #tpu.memory_space<vmem>>, vector<1x1x256xf32>
    %18 = vector.shape_cast %17 : vector<1x1x256xf32> to vector<1x256xf32>
    %c0_13 = arith.constant 0 : index
    %c0_14 = arith.constant 0 : index
    %19 = vector.load %arg15[%c0_13, %c0_14] : memref<1x256xf32, #tpu.memory_space<vmem>>, vector<1x256xf32>
    %c0_15 = arith.constant 0 : index
    %c0_16 = arith.constant 0 : index
    %20 = vector.load %arg16[%c0_15, %c0_16] : memref<1x256xf32, #tpu.memory_space<vmem>>, vector<1x256xf32>
    %cst_17 = arith.constant 0.000000e+00 : f32
    %21 = vector.broadcast %cst_17 : f32 to vector<1x256xf32>
    %22 = arith.subf %21, %19 : vector<1x256xf32>
    %cst_18 = arith.constant 5.000000e-01 : f32
    %23 = vector.broadcast %cst_18 : f32 to vector<1x256xf32>
    %24 = arith.mulf %23, %18 : vector<1x256xf32>
    %25 = arith.addf %22, %24 : vector<1x256xf32>
    %cst_19 = arith.constant 2.000000e-01 : f32
    %26 = vector.broadcast %cst_19 : f32 to vector<1x256xf32>
    %27 = arith.mulf %26, %25 : vector<1x256xf32>
    %28 = arith.addf %19, %27 : vector<1x256xf32>
    %cst_20 = arith.constant 5.000000e-02 : f32
    %29 = vector.broadcast %cst_20 : f32 to vector<1x256xf32>
    %30 = arith.mulf %29, %20 : vector<1x256xf32>
    %31 = arith.subf %20, %30 : vector<1x256xf32>
    %cst_21 = arith.constant 1.000000e-01 : f32
    %32 = vector.broadcast %cst_21 : f32 to vector<1x256xf32>
    %33 = arith.mulf %32, %28 : vector<1x256xf32>
    %34 = arith.addf %31, %33 : vector<1x256xf32>
    %c0_22 = arith.constant 0 : index
    %c0_23 = arith.constant 0 : index
    %35 = vector.load %arg15[%c0_22, %c0_23] : memref<1x256xf32, #tpu.memory_space<vmem>>, vector<1x256xf32>
    tpu.vector_store %arg15[%c0_22, %c0_23], %28 {strides = array<i32>} : memref<1x256xf32, #tpu.memory_space<vmem>>, vector<1x256xf32>,
    %c0_24 = arith.constant 0 : index
    %c0_25 = arith.constant 0 : index
    %36 = vector.load %arg16[%c0_24, %c0_25] : memref<1x256xf32, #tpu.memory_space<vmem>>, vector<1x256xf32>
    tpu.vector_store %arg16[%c0_24, %c0_25], %34 {strides = array<i32>} : memref<1x256xf32, #tpu.memory_space<vmem>>, vector<1x256xf32>,
    %c0_26 = arith.constant 0 : index
    %c0_27 = arith.constant 0 : index
    %c0_28 = arith.constant 0 : index
    %37 = vector.load %arg9[%c0_26, %c0_27, %c0_28] : memref<1x1x128xf32, #tpu.memory_space<vmem>>, vector<1x1x128xf32>
    %38 = vector.shape_cast %37 : vector<1x1x128xf32> to vector<1x128xf32>
    %c0_29 = arith.constant 0 : index
    %c0_30 = arith.constant 0 : index
    %39 = vector.load %arg13[%c0_29, %c0_30] : memref<1x128xf32, #tpu.memory_space<vmem>>, vector<1x128xf32>
    %c0_31 = arith.constant 0 : index
    %c0_32 = arith.constant 0 : index
    %40 = vector.load %arg14[%c0_31, %c0_32] : memref<1x128xf32, #tpu.memory_space<vmem>>, vector<1x128xf32>
    %cst_33 = arith.constant 0.000000e+00 : f32
    %41 = vector.broadcast %cst_33 : f32 to vector<1x128xf32>
    %42 = arith.subf %41, %39 : vector<1x128xf32>
    %cst_34 = arith.constant 5.000000e-01 : f32
    %43 = vector.broadcast %cst_34 : f32 to vector<1x128xf32>
    %44 = arith.mulf %43, %38 : vector<1x128xf32>
    %45 = arith.addf %42, %44 : vector<1x128xf32>
    %cst_35 = arith.constant 2.000000e-01 : f32
    %46 = vector.broadcast %cst_35 : f32 to vector<1x128xf32>
    %47 = arith.mulf %46, %45 : vector<1x128xf32>
    %48 = arith.addf %39, %47 : vector<1x128xf32>
    %cst_36 = arith.constant 5.000000e-02 : f32
    %49 = vector.broadcast %cst_36 : f32 to vector<1x128xf32>
    %50 = arith.mulf %49, %40 : vector<1x128xf32>
    %51 = arith.subf %40, %50 : vector<1x128xf32>
    %cst_37 = arith.constant 1.000000e-01 : f32
    %52 = vector.broadcast %cst_37 : f32 to vector<1x128xf32>
    %53 = arith.mulf %52, %48 : vector<1x128xf32>
    %54 = arith.addf %51, %53 : vector<1x128xf32>
    %c0_38 = arith.constant 0 : index
    %c0_39 = arith.constant 0 : index
    %55 = vector.load %arg13[%c0_38, %c0_39] : memref<1x128xf32, #tpu.memory_space<vmem>>, vector<1x128xf32>
    tpu.vector_store %arg13[%c0_38, %c0_39], %48 {strides = array<i32>} : memref<1x128xf32, #tpu.memory_space<vmem>>, vector<1x128xf32>,
    %c0_40 = arith.constant 0 : index
    %c0_41 = arith.constant 0 : index
    %56 = vector.load %arg14[%c0_40, %c0_41] : memref<1x128xf32, #tpu.memory_space<vmem>>, vector<1x128xf32>
    tpu.vector_store %arg14[%c0_40, %c0_41], %54 {strides = array<i32>} : memref<1x128xf32, #tpu.memory_space<vmem>>, vector<1x128xf32>,
    %c0_42 = arith.constant 0 : index
    %c0_43 = arith.constant 0 : index
    %c0_44 = arith.constant 0 : index
    %57 = vector.load %arg10[%c0_42, %c0_43, %c0_44] : memref<1x256x128xbf16, #tpu.memory_space<vmem>>, vector<1x256x128xbf16>
    %58 = vector.shape_cast %57 : vector<1x256x128xbf16> to vector<256x128xbf16>
    %59 = arith.truncf %34 : vector<1x256xf32> to vector<1x256xbf16>
    %60 = arith.extf %59 : vector<1x256xbf16> to vector<1x256xf32>
    %61 = arith.subf %34, %60 : vector<1x256xf32>
    %62 = arith.truncf %61 : vector<1x256xf32> to vector<1x256xbf16>
    %cst_45 = arith.constant dense<0.000000e+00> : vector<1x128xf32>
    %63 = tpu.matmul %59, %58, %cst_45 {dimension_numbers = #tpu.dot_dimension_numbers<[1], [0], [0], [1], [0, 0, 1, 1], [], []>} : vector<1x256xbf16>, vector<256x128xbf16>, vector<1x128xf32> -> vector<1x128xf32>
    %cst_46 = arith.constant dense<0.000000e+00> : vector<1x128xf32>
    %64 = tpu.matmul %62, %58, %cst_46 {dimension_numbers = #tpu.dot_dimension_numbers<[1], [0], [0], [1], [0, 0, 1, 1], [], []>} : vector<1x256xbf16>, vector<256x128xbf16>, vector<1x128xf32> -> vector<1x128xf32>
    %65 = arith.addf %63, %64 : vector<1x128xf32>
    %66 = arith.addf %65, %15 : vector<1x128xf32>
    %c0_47 = arith.constant 0 : index
    %c0_48 = arith.constant 0 : index
    %c0_49 = arith.constant 0 : index
    %67 = vector.load %arg11[%c0_47, %c0_48, %c0_49] : memref<1x1x128xf32, #tpu.memory_space<vmem>>, vector<1x1x128xf32>
    %68 = vector.shape_cast %67 : vector<1x1x128xf32> to vector<1x128xf32>
    %69 = vector.shape_cast %66 : vector<1x128xf32> to vector<1x1x128xf32>
    tpu.vector_store %arg11[%c0_47, %c0_48, %c0_49], %69 {strides = array<i32>} : memref<1x1x128xf32, #tpu.memory_space<vmem>>, vector<1x1x128xf32>,
    return
  }
  func.func @transform_0(%arg0: i32, %arg1: i32) -> (i32, i32) {
    %c0_i32 = arith.constant 0 : i32
    %c0_i32_0 = arith.constant 0 : i32
    return %c0_i32, %arg0 : i32, i32
  }
  func.func @transform_1(%arg0: i32, %arg1: i32) -> (i32, i32) {
    %c0_i32 = arith.constant 0 : i32
    %c0_i32_0 = arith.constant 0 : i32
    %c0_i32_1 = arith.constant 0 : i32
    return %c0_i32, %c0_i32_0 : i32, i32
  }
  func.func @transform_2(%arg0: i32, %arg1: i32) -> (i32, i32) {
    %c0_i32 = arith.constant 0 : i32
    %c0_i32_0 = arith.constant 0 : i32
    %c0_i32_1 = arith.constant 0 : i32
    return %c0_i32, %c0_i32_0 : i32, i32
  }
  func.func @transform_3(%arg0: i32, %arg1: i32) -> (i32, i32) {
    %c0_i32 = arith.constant 0 : i32
    %c0_i32_0 = arith.constant 0 : i32
    return %c0_i32, %arg0 : i32, i32
  }
  func.func @transform_4(%arg0: i32, %arg1: i32) -> (i32, i32) {
    %c0_i32 = arith.constant 0 : i32
    %c0_i32_0 = arith.constant 0 : i32
    return %c0_i32, %arg0 : i32, i32
  }
  func.func @transform_5(%arg0: i32, %arg1: i32) -> (i32, i32, i32) {
    %c0_i32 = arith.constant 0 : i32
    %c0_i32_0 = arith.constant 0 : i32
    return %arg1, %c0_i32, %arg0 : i32, i32, i32
  }
  func.func @transform_6(%arg0: i32, %arg1: i32) -> (i32, i32, i32) {
    %c0_i32 = arith.constant 0 : i32
    %c0_i32_0 = arith.constant 0 : i32
    %c0_i32_1 = arith.constant 0 : i32
    return %arg1, %c0_i32, %c0_i32_0 : i32, i32, i32
  }
  func.func @transform_7(%arg0: i32, %arg1: i32) -> (i32, i32, i32) {
    %c0_i32 = arith.constant 0 : i32
    %c0_i32_0 = arith.constant 0 : i32
    return %arg1, %c0_i32, %arg0 : i32, i32, i32
  }
  func.func @transform_8(%arg0: i32, %arg1: i32) -> (i32, i32, i32) {
    %c0_i32 = arith.constant 0 : i32
    %c0_i32_0 = arith.constant 0 : i32
    %c0_i32_1 = arith.constant 0 : i32
    return %arg0, %c0_i32, %c0_i32_0 : i32, i32, i32
  }
  func.func @transform_9(%arg0: i32, %arg1: i32) -> (i32, i32, i32) {
    %c0_i32 = arith.constant 0 : i32
    %c0_i32_0 = arith.constant 0 : i32
    return %arg1, %c0_i32, %arg0 : i32, i32, i32
  }
  func.func @transform_10(%arg0: i32, %arg1: i32) -> (i32, i32) {
    %c0_i32 = arith.constant 0 : i32
    %c0_i32_0 = arith.constant 0 : i32
    return %c0_i32, %arg0 : i32, i32
  }
  func.func @transform_11(%arg0: i32, %arg1: i32) -> (i32, i32) {
    %c0_i32 = arith.constant 0 : i32
    %c0_i32_0 = arith.constant 0 : i32
    return %c0_i32, %arg0 : i32, i32
  }
  func.func @transform_12(%arg0: i32, %arg1: i32) -> (i32, i32) {
    %c0_i32 = arith.constant 0 : i32
    %c0_i32_0 = arith.constant 0 : i32
    return %c0_i32, %arg0 : i32, i32
  }
}

</mosaic_0001>

<llo_original>
// kernel: syn_forward_fused.1
$region0: #{syn_forward_fused.1}
  #allocation0 [shape = 'u32[]', space=smem, size = 0x4, offset = 0x4, fixed_abs, tag = 'smem constant byte address 0x4 - core index']
  #allocation1 [shape = 'u32[144,128]{1,0:T(1,128)}', space=vmem, size = 0x12000, scoped, tag = 'internal scratch']
  #allocation2 [shape = 'f32[1,256]{1,0:T(1,128)}', space=vmem, size = 0x400, scoped, tag = 'scratch operand']
  #allocation3 [shape = 'f32[1,256]{1,0:T(1,128)}', space=vmem, size = 0x400, scoped, tag = 'scratch operand']
  %s0 = inlined_call_operand.vmem [shape: f32[1,256], index: 0, kind: input, shape index: {}]
  %s1 = inlined_call_operand.vmem [shape: f32[1,256], index: 1, kind: input, shape index: {}, may-alias: {1,3}]
  %s2 = inlined_call_operand.vmem [shape: f32[1,256], index: 2, kind: input, shape index: {}, may-alias: {2,4}]
  %s3 = inlined_call_operand.vmem [shape: f32[1,256], index: 3, kind: input, shape index: {}, may-alias: {1,3}]
  %s4 = inlined_call_operand.vmem [shape: f32[1,256], index: 4, kind: input, shape index: {}, may-alias: {2,4}]
  %s5 = inlined_call_operand.vmem [shape: f32[8,1,256], index: 5, kind: input, shape index: {}]
  %s6 = inlined_call_operand.vmem [shape: f32[8,1,256], index: 6, kind: input, shape index: {}, may-alias: {6,7}]
  %s7 = inlined_call_operand.vmem [shape: f32[8,1,256], index: 7, kind: input, shape index: {}, may-alias: {6,7}]
  %s8 = inlined_call_operand.hbm [shape: bf16[2,256,128], index: 8, kind: input, shape index: {}]
  %s9 = inlined_call_operand.vmem [shape: f32[8,1,256], index: 9, kind: output, shape index: {0}]
  %s10 = inlined_call_operand.hbm [shape: f32[1,256], index: 10, kind: output, shape index: {1}]
  %s11 = inlined_call_operand.hbm [shape: f32[1,256], index: 11, kind: output, shape index: {2}]
  %s12 = inlined_call_operand.hbm [shape: f32[1,256], index: 12, kind: output, shape index: {3}]
  %13 = xla_tuple %s9, %s10, %s11, %s12
  %s14 = sld [smem:[#allocation0]]
  $region101: #{syn_forward_fused.1} parent=0
    _
  %s16 = ssub.s32 1, %s14
  %s17 = scalar_select 0, %s16, %s14
  $region1: #{syn_forward_fused.1} parent=0
    #allocation4 [shape = 'u8[131072]{0}', space=vmem, size = 0x20000, scoped, tag = 'input window, operand 8']
    #allocation5 [shape = 's32[2]{0}', space=sflag, size = 0x8, scoped, tag = 'scoped memory for syn_forward_fused.1']
    #allocation6 [shape = 's32[2]{0}', space=sflag, size = 0x8, scoped, tag = 'scoped memory for syn_forward_fused.1']
    #allocation7 [shape = 'u8[1024]{0}', space=vmem, size = 0x400, scoped, tag = 'output window, operand 1']
    #allocation8 [shape = 'u8[1024]{0}', space=vmem, size = 0x400, scoped, tag = 'output window, operand 2']
    #allocation9 [shape = 's32[2]{0}', space=sflag, size = 0x8, scoped, tag = 'scoped memory for syn_forward_fused.1']
    #allocation10 [shape = 'u8[1024]{0}', space=vmem, size = 0x400, scoped, tag = 'output window, operand 3']
    %18 = vsyncpa [#allocation5], 0
    %s19 = scalar_lea.sflag [#allocation5], 1
    %20 = vsyncpa %s19, 0
    %21 = vsyncpa [#allocation6], 0
    %s22 = scalar_lea.sflag [#allocation6], 1
    %23 = vsyncpa %s22, 0
    %24 = vsyncpa [#allocation9], 0
    %s25 = scalar_lea.sflag [#allocation9], 1
    %26 = vsyncpa %s25, 0
    loop: start=0, step=1, limit=18
    $region2: #{syn_forward_fused.1} parent=1 // loop_pre_header
      _
    $region3: #{syn_forward_fused.1} parent=1 // loop_header
      %s28 = sphi 0, %s32
      %p29 = scmp.ge.s32.totalorder %s28, 18
      %s35 = sphi 0, %s47
      %s36 = sphi 0, %s43
      %s37 = sphi 0, %s35
      %s38 = sphi 0, %s36
      %s39 = sphi 0, %s37
      %s40 = sphi 0, %s38
      %s50 = sphi 0, %s52
      %s53 = sphi 0, %s50
      %s54 = sphi 0, %s53
      %s70 = sphi 0, %s54
      %s74 = sphi 0, %s74
      %s76 = sphi 0, %s74
      %s77 = sphi 0, %s76
      %s91 = sphi 0, %s77
      %s95 = sphi 0, %s95
      %s97 = sphi 0, %s95
      %s98 = sphi 0, %s97
      %s112 = sphi 0, %s98
      %s118 = sphi 0, %s120
      %s121 = sphi 0, %s118
      %s122 = sphi 0, %s121
      %s138 = sphi 0, %s122
      %s144 = sphi 0, %s146
      %s147 = sphi 0, %s144
      %s148 = sphi 0, %s147
      %s164 = sphi 0, %s148
      %s172 = sphi 0, %s174
      %s175 = sphi 0, %s172
      %s176 = sphi 0, %s175
      %s192 = sphi 0, %s176
      %s198 = sphi 0, %s200
      %s201 = sphi 0, %s198
      %s202 = sphi 0, %s201
      %s218 = sphi 0, %s202
      %s226 = sphi 0, %s228
      %s229 = sphi 0, %s226
      %s230 = sphi 0, %s229
      %s246 = sphi 0, %s230
      %s252 = sphi 0, %s254
      %s255 = sphi 0, %s252
      %s256 = sphi 0, %s255
      %s272 = sphi 0, %s256
      %s280 = sphi 0, %s282
      %s283 = sphi 0, %s280
      %s284 = sphi 0, %s283
      %s300 = sphi 0, %s284
      %s306 = sphi 0, %s308
      %s309 = sphi 0, %s306
      %s310 = sphi 0, %s309
      %s326 = sphi 0, %s310
      %s332 = sphi 0, %s334
      %s335 = sphi 0, %s332
      %s336 = sphi 0, %s335
      %s352 = sphi 0, %s336
      %s358 = sphi 0, %s360
      %s361 = sphi 0, %s358
      %s362 = sphi 0, %s361
      %s378 = sphi 0, %s362
    $region4: #{syn_forward_fused.1} parent=1 // loop_header_branch
      %31 = sbr.rel (%p29) target = $region8
    $region5: #{syn_forward_fused.1} parent=1 // loop_body
      %s33 = ssub.s32 %s28, 1
      %s34 = ssub.s32 %s28, 2
      %s41 = sadd.s32 1, %s36
      %p42 = scmp.ge.s32.totalorder %s41, 8
      %s43 = scalar_select %p42, 0, %s41
      %s44 = sadd.s32 1, %s35
      %s45 = scalar_select %p42, %s44, %s35
      %p46 = scmp.ge.s32.totalorder %s45, 2
      %s47 = scalar_select %p46, 0, %s45
      %s48 = ssub.s32 %s35, %s47
      %p49 = scmp.eq.s32.totalorder %s48, 0
      %s51 = sadd.s32 %s50, 1
      %s52 = scalar_select %p49, %s50, %s51
      %p55 = pneg %p49
      %p56 = scmp.eq.s32.totalorder %s28, 15
      %p57 = por %p55, %p56
      %p58 = scmp.ne.s32.totalorder %s50, %s53
      %p59 = scmp.eq.s32.totalorder %s28, 0
      %p60 = por %p58, %p59
      %p61 = scmp.ne.s32.totalorder %s50, %s53
      %p62 = scmp.eq.s32.totalorder %s33, 15
      %p63 = por %p61, %p62
      %p64 = scmp.ne.s32.totalorder %s53, %s54
      %p65 = scmp.eq.s32.totalorder %s33, 0
      %p66 = por %p64, %p65
      %p67 = scmp.ne.s32.totalorder %s53, %s54
      %p68 = scmp.eq.s32.totalorder %s34, 15
      %p69 = por %p67, %p68
      %p71 = scmp.ne.s32.totalorder %s54, %s70
      %p72 = scmp.eq.s32.totalorder %s34, 0
      %p73 = por %p71, %p72
      %s75 = sadd.s32 %s74, 1
      %p78 = scmp.eq.s32.totalorder %s28, 15
      %p79 = scmp.ne.s32.totalorder %s74, %s76
      %p80 = scmp.eq.s32.totalorder %s28, 0
      %p81 = por %p79, %p80
      %p82 = scmp.ne.s32.totalorder %s74, %s76
      %p83 = scmp.eq.s32.totalorder %s33, 15
      %p84 = por %p82, %p83
      %p85 = scmp.ne.s32.totalorder %s76, %s77
      %p86 = scmp.eq.s32.totalorder %s33, 0
      %p87 = por %p85, %p86
      %p88 = scmp.ne.s32.totalorder %s76, %s77
      %p89 = scmp.eq.s32.totalorder %s34, 15
      %p90 = por %p88, %p89
      %p92 = scmp.ne.s32.totalorder %s77, %s91
      %p93 = scmp.eq.s32.totalorder %s34, 0
      %p94 = por %p92, %p93
      %s96 = sadd.s32 %s95, 1
      %p99 = scmp.eq.s32.totalorder %s28, 15
      %p100 = scmp.ne.s32.totalorder %s95, %s97
      %p101 = scmp.eq.s32.totalorder %s28, 0
      %p102 = por %p100, %p101
      %p103 = scmp.ne.s32.totalorder %s95, %s97
      %p104 = scmp.eq.s32.totalorder %s33, 15
      %p105 = por %p103, %p104
      %p106 = scmp.ne.s32.totalorder %s97, %s98
      %p107 = scmp.eq.s32.totalorder %s33, 0
      %p108 = por %p106, %p107
      %p109 = scmp.ne.s32.totalorder %s97, %s98
      %p110 = scmp.eq.s32.totalorder %s34, 15
      %p111 = por %p109, %p110
      %p113 = scmp.ne.s32.totalorder %s98, %s112
      %p114 = scmp.eq.s32.totalorder %s34, 0
      %p115 = por %p113, %p114
      %s116 = ssub.s32 %s35, %s47
      %p117 = scmp.eq.s32.totalorder %s116, 0
      %s119 = sadd.s32 %s118, 1
      %s120 = scalar_select %p117, %s118, %s119
      %p123 = pneg %p117
      %p124 = scmp.eq.s32.totalorder %s28, 15
      %p125 = por %p123, %p124
      %p126 = scmp.ne.s32.totalorder %s118, %s121
      %p127 = scmp.eq.s32.totalorder %s28, 0
      %p128 = por %p126, %p127
      %p129 = scmp.ne.s32.totalorder %s118, %s121
      %p130 = scmp.eq.s32.totalorder %s33, 15
      %p131 = por %p129, %p130
      %p132 = scmp.ne.s32.totalorder %s121, %s122
      %p133 = scmp.eq.s32.totalorder %s33, 0
      %p134 = por %p132, %p133
      %p135 = scmp.ne.s32.totalorder %s121, %s122
      %p136 = scmp.eq.s32.totalorder %s34, 15
      %p137 = por %p135, %p136
      %p139 = scmp.ne.s32.totalorder %s122, %s138
      %p140 = scmp.eq.s32.totalorder %s34, 0
      %p141 = por %p139, %p140
      %s142 = ssub.s32 %s35, %s47
      %p143 = scmp.eq.s32.totalorder %s142, 0
      %s145 = sadd.s32 %s144, 1
      %s146 = scalar_select %p143, %s144, %s145
      %p149 = pneg %p143
      %p150 = scmp.eq.s32.totalorder %s28, 15
      %p151 = por %p149, %p150
      %p152 = scmp.ne.s32.totalorder %s144, %s147
      %p153 = scmp.eq.s32.totalorder %s28, 0
      %p154 = por %p152, %p153
      %p155 = scmp.ne.s32.totalorder %s144, %s147
      %p156 = scmp.eq.s32.totalorder %s33, 15
      %p157 = por %p155, %p156
      %p158 = scmp.ne.s32.totalorder %s147, %s148
      %p159 = scmp.eq.s32.totalorder %s33, 0
      %p160 = por %p158, %p159
      %p161 = scmp.ne.s32.totalorder %s147, %s148
      %p162 = scmp.eq.s32.totalorder %s34, 15
      %p163 = por %p161, %p162
      %p165 = scmp.ne.s32.totalorder %s148, %s164
      %p166 = scmp.eq.s32.totalorder %s34, 0
      %p167 = por %p165, %p166
      %s168 = ssub.s32 %s36, %s43
      %s169 = ssub.s32 %s35, %s47
      %s170 = sor.u32 %s168, %s169
      %p171 = scmp.eq.s32.totalorder %s170, 0
      %s173 = sadd.s32 %s172, 1
      %s174 = scalar_select %p171, %s172, %s173
      %p177 = pneg %p171
      %p178 = scmp.eq.s32.totalorder %s28, 15
      %p179 = por %p177, %p178
      %p180 = scmp.ne.s32.totalorder %s172, %s175
      %p181 = scmp.eq.s32.totalorder %s28, 0
      %p182 = por %p180, %p181
      %p183 = scmp.ne.s32.totalorder %s172, %s175
      %p184 = scmp.eq.s32.totalorder %s33, 15
      %p185 = por %p183, %p184
      %p186 = scmp.ne.s32.totalorder %s175, %s176
      %p187 = scmp.eq.s32.totalorder %s33, 0
      %p188 = por %p186, %p187
      %p189 = scmp.ne.s32.totalorder %s175, %s176
      %p190 = scmp.eq.s32.totalorder %s34, 15
      %p191 = por %p189, %p190
      %p193 = scmp.ne.s32.totalorder %s176, %s192
      %p194 = scmp.eq.s32.totalorder %s34, 0
      %p195 = por %p193, %p194
      %s196 = ssub.s32 %s36, %s43
      %p197 = scmp.eq.s32.totalorder %s196, 0
      %s199 = sadd.s32 %s198, 1
      %s200 = scalar_select %p197, %s198, %s199
      %p203 = pneg %p197
      %p204 = scmp.eq.s32.totalorder %s28, 15
      %p205 = por %p203, %p204
      %p206 = scmp.ne.s32.totalorder %s198, %s201
      %p207 = scmp.eq.s32.totalorder %s28, 0
      %p208 = por %p206, %p207
      %p209 = scmp.ne.s32.totalorder %s198, %s201
      %p210 = scmp.eq.s32.totalorder %s33, 15
      %p211 = por %p209, %p210
      %p212 = scmp.ne.s32.totalorder %s201, %s202
      %p213 = scmp.eq.s32.totalorder %s33, 0
      %p214 = por %p212, %p213
      %p215 = scmp.ne.s32.totalorder %s201, %s202
      %p216 = scmp.eq.s32.totalorder %s34, 15
      %p217 = por %p215, %p216
      %p219 = scmp.ne.s32.totalorder %s202, %s218
      %p220 = scmp.eq.s32.totalorder %s34, 0
      %p221 = por %p219, %p220
      %s222 = ssub.s32 %s36, %s43
      %s223 = ssub.s32 %s35, %s47
      %s224 = sor.u32 %s222, %s223
      %p225 = scmp.eq.s32.totalorder %s224, 0
      %s227 = sadd.s32 %s226, 1
      %s228 = scalar_select %p225, %s226, %s227
      %p231 = pneg %p225
      %p232 = scmp.eq.s32.totalorder %s28, 15
      %p233 = por %p231, %p232
      %p234 = scmp.ne.s32.totalorder %s226, %s229
      %p235 = scmp.eq.s32.totalorder %s28, 0
      %p236 = por %p234, %p235
      %p237 = scmp.ne.s32.totalorder %s226, %s229
      %p238 = scmp.eq.s32.totalorder %s33, 15
      %p239 = por %p237, %p238
      %p240 = scmp.ne.s32.totalorder %s229, %s230
      %p241 = scmp.eq.s32.totalorder %s33, 0
      %p242 = por %p240, %p241
      %p243 = scmp.ne.s32.totalorder %s229, %s230
      %p244 = scmp.eq.s32.totalorder %s34, 15
      %p245 = por %p243, %p244
      %p247 = scmp.ne.s32.totalorder %s230, %s246
      %p248 = scmp.eq.s32.totalorder %s34, 0
      %p249 = por %p247, %p248
      %s250 = ssub.s32 %s35, %s47
      %p251 = scmp.eq.s32.totalorder %s250, 0
      %s253 = sadd.s32 %s252, 1
      %s254 = scalar_select %p251, %s252, %s253
      %p257 = pneg %p251
      %p258 = scmp.eq.s32.totalorder %s28, 15
      %p259 = por %p257, %p258
      %p260 = scmp.ne.s32.totalorder %s252, %s255
      %p261 = scmp.eq.s32.totalorder %s28, 0
      %p262 = por %p260, %p261
      %p263 = scmp.ne.s32.totalorder %s252, %s255
      %p264 = scmp.eq.s32.totalorder %s33, 15
      %p265 = por %p263, %p264
      %p266 = scmp.ne.s32.totalorder %s255, %s256
      %p267 = scmp.eq.s32.totalorder %s33, 0
      %p268 = por %p266, %p267
      %p269 = scmp.ne.s32.totalorder %s255, %s256
      %p270 = scmp.eq.s32.totalorder %s34, 15
      %p271 = por %p269, %p270
      %p273 = scmp.ne.s32.totalorder %s256, %s272
      %p274 = scmp.eq.s32.totalorder %s34, 0
      %p275 = por %p273, %p274
      %s276 = ssub.s32 %s36, %s43
      %s277 = ssub.s32 %s35, %s47
      %s278 = sor.u32 %s276, %s277
      %p279 = scmp.eq.s32.totalorder %s278, 0
      %s281 = sadd.s32 %s280, 1
      %s282 = scalar_select %p279, %s280, %s281
      %p285 = pneg %p279
      %p286 = scmp.eq.s32.totalorder %s28, 15
      %p287 = por %p285, %p286
      %p288 = scmp.ne.s32.totalorder %s280, %s283
      %p289 = scmp.eq.s32.totalorder %s28, 0
      %p290 = por %p288, %p289
      %p291 = scmp.ne.s32.totalorder %s280, %s283
      %p292 = scmp.eq.s32.totalorder %s33, 15
      %p293 = por %p291, %p292
      %p294 = scmp.ne.s32.totalorder %s283, %s284
      %p295 = scmp.eq.s32.totalorder %s33, 0
      %p296 = por %p294, %p295
      %p297 = scmp.ne.s32.totalorder %s283, %s284
      %p298 = scmp.eq.s32.totalorder %s34, 15
      %p299 = por %p297, %p298
      %p301 = scmp.ne.s32.totalorder %s284, %s300
      %p302 = scmp.eq.s32.totalorder %s34, 0
      %p303 = por %p301, %p302
      %s304 = ssub.s32 %s35, %s47
      %p305 = scmp.eq.s32.totalorder %s304, 0
      %s307 = sadd.s32 %s306, 1
      %s308 = scalar_select %p305, %s306, %s307
      %p311 = pneg %p305
      %p312 = scmp.eq.s32.totalorder %s28, 15
      %p313 = por %p311, %p312
      %p314 = scmp.ne.s32.totalorder %s306, %s309
      %p315 = scmp.eq.s32.totalorder %s28, 0
      %p316 = por %p314, %p315
      %p317 = scmp.ne.s32.totalorder %s306, %s309
      %p318 = scmp.eq.s32.totalorder %s33, 15
      %p319 = por %p317, %p318
      %p320 = scmp.ne.s32.totalorder %s309, %s310
      %p321 = scmp.eq.s32.totalorder %s33, 0
      %p322 = por %p320, %p321
      %p323 = scmp.ne.s32.totalorder %s309, %s310
      %p324 = scmp.eq.s32.totalorder %s34, 15
      %p325 = por %p323, %p324
      %p327 = scmp.ne.s32.totalorder %s310, %s326
      %p328 = scmp.eq.s32.totalorder %s34, 0
      %p329 = por %p327, %p328
      %s330 = ssub.s32 %s35, %s47
      %p331 = scmp.eq.s32.totalorder %s330, 0
      %s333 = sadd.s32 %s332, 1
      %s334 = scalar_select %p331, %s332, %s333
      %p337 = pneg %p331
      %p338 = scmp.eq.s32.totalorder %s28, 15
      %p339 = por %p337, %p338
      %p340 = scmp.ne.s32.totalorder %s332, %s335
      %p341 = scmp.eq.s32.totalorder %s28, 0
      %p342 = por %p340, %p341
      %p343 = scmp.ne.s32.totalorder %s332, %s335
      %p344 = scmp.eq.s32.totalorder %s33, 15
      %p345 = por %p343, %p344
      %p346 = scmp.ne.s32.totalorder %s335, %s336
      %p347 = scmp.eq.s32.totalorder %s33, 0
      %p348 = por %p346, %p347
      %p349 = scmp.ne.s32.totalorder %s335, %s336
      %p350 = scmp.eq.s32.totalorder %s34, 15
      %p351 = por %p349, %p350
      %p353 = scmp.ne.s32.totalorder %s336, %s352
      %p354 = scmp.eq.s32.totalorder %s34, 0
      %p355 = por %p353, %p354
      %s356 = ssub.s32 %s35, %s47
      %p357 = scmp.eq.s32.totalorder %s356, 0
      %s359 = sadd.s32 %s358, 1
      %s360 = scalar_select %p357, %s358, %s359
      %p363 = pneg %p357
      %p364 = scmp.eq.s32.totalorder %s28, 15
      %p365 = por %p363, %p364
      %p366 = scmp.ne.s32.totalorder %s358, %s361
      %p367 = scmp.eq.s32.totalorder %s28, 0
      %p368 = por %p366, %p367
      %p369 = scmp.ne.s32.totalorder %s358, %s361
      %p370 = scmp.eq.s32.totalorder %s33, 15
      %p371 = por %p369, %p370
      %p372 = scmp.ne.s32.totalorder %s361, %s362
      %p373 = scmp.eq.s32.totalorder %s33, 0
      %p374 = por %p372, %p373
      %p375 = scmp.ne.s32.totalorder %s361, %s362
      %p376 = scmp.eq.s32.totalorder %s34, 15
      %p377 = por %p375, %p376
      %p379 = scmp.ne.s32.totalorder %s362, %s378
      %p380 = scmp.eq.s32.totalorder %s34, 0
      %p381 = por %p379, %p380
      %p382 = scmp.le.s32.totalorder 1, %s28
      %p383 = scmp.lt.s32.totalorder %s28, 17
      %p384 = pnand %p382, %p383
      %p385 = pneg %p384
      // Predicated region
      $region9: #{syn_forward_fused.1} parent=5 // pred_check
        _
      $region10: #{syn_forward_fused.1} parent=5 // pred_check_branch
        %387 = sbr.rel (%p384) target = $region12
      $region11: #{syn_forward_fused.1} parent=5 // pred_region
        %s388 = ssub.s32 %s28, 1
        // Predicated region
        $region13: #{syn_forward_fused.1} parent=11 // pred_check
          %p389 = pneg %p87
        $region14: #{syn_forward_fused.1} parent=11 // pred_check_branch
          %391 = sbr.rel (%p389) target = $region16
        $region15: #{syn_forward_fused.1} parent=11 // pred_region
          _
        $region16: #{syn_forward_fused.1} parent=11 // pred_fallthru
          _
        // Predicated region
        $region17: #{syn_forward_fused.1} parent=11 // pred_check
          %p392 = pneg %p108
        $region18: #{syn_forward_fused.1} parent=11 // pred_check_branch
          %394 = sbr.rel (%p392) target = $region20
        $region19: #{syn_forward_fused.1} parent=11 // pred_region
          _
        $region20: #{syn_forward_fused.1} parent=11 // pred_fallthru
          _
      $region12: #{syn_forward_fused.1} parent=5 // pred_fallthru
        _
      %p395 = scmp.lt.s32.totalorder %s28, 16
      // Predicated region
      $region21: #{syn_forward_fused.1} parent=5 // pred_check
        %p396 = pneg %p395
      $region22: #{syn_forward_fused.1} parent=5 // pred_check_branch
        %398 = sbr.rel (%p396) target = $region24
      $region23: #{syn_forward_fused.1} parent=5 // pred_region
        // Predicated region
        $region25: #{syn_forward_fused.1} parent=23 // pred_check
          %p399 = pneg %p60
        $region26: #{syn_forward_fused.1} parent=23 // pred_check_branch
          %401 = sbr.rel (%p399) target = $region28
        $region27: #{syn_forward_fused.1} parent=23 // pred_region
          %p402 = scmp.lt.s32.totalorder %s35, 1
          %s403 = scalar_select %p402, %s35, 1
          %s404 = scalar_lea.vmem %s0, %s403
        $region28: #{syn_forward_fused.1} parent=23 // pred_fallthru
          _
        // Predicated region
        $region29: #{syn_forward_fused.1} parent=23 // pred_check
          %p405 = pneg %p128
        $region30: #{syn_forward_fused.1} parent=23 // pred_check_branch
          %407 = sbr.rel (%p405) target = $region32
        $region31: #{syn_forward_fused.1} parent=23 // pred_region
          %p408 = scmp.lt.s32.totalorder %s35, 1
          %s409 = scalar_select %p408, %s35, 1
          %s410 = scalar_lea.vmem %s3, %s409
        $region32: #{syn_forward_fused.1} parent=23 // pred_fallthru
          _
        // Predicated region
        $region33: #{syn_forward_fused.1} parent=23 // pred_check
          %p411 = pneg %p154
        $region34: #{syn_forward_fused.1} parent=23 // pred_check_branch
          %413 = sbr.rel (%p411) target = $region36
        $region35: #{syn_forward_fused.1} parent=23 // pred_region
          %p414 = scmp.lt.s32.totalorder %s35, 1
          %s415 = scalar_select %p414, %s35, 1
          %s416 = scalar_lea.vmem %s4, %s415
        $region36: #{syn_forward_fused.1} parent=23 // pred_fallthru
          _
        // Predicated region
        $region37: #{syn_forward_fused.1} parent=23 // pred_check
          %p417 = pneg %p182
        $region38: #{syn_forward_fused.1} parent=23 // pred_check_branch
          %419 = sbr.rel (%p417) target = $region40
        $region39: #{syn_forward_fused.1} parent=23 // pred_region
          %p420 = scmp.lt.s32.totalorder %s36, 7
          %s421 = scalar_select %p420, %s36, 7
          %p422 = scmp.lt.s32.totalorder %s35, 1
          %s423 = scalar_select %p422, %s35, 1
          %s424 = smul.addr %s421, 2
          %s425 = sadd.s32 %s423, %s424
          %s426 = scalar_lea.vmem %s5, %s425
        $region40: #{syn_forward_fused.1} parent=23 // pred_fallthru
          _
        // Predicated region
        $region41: #{syn_forward_fused.1} parent=23 // pred_check
          %p427 = pneg %p208
        $region42: #{syn_forward_fused.1} parent=23 // pred_check_branch
          %429 = sbr.rel (%p427) target = $region44
        $region43: #{syn_forward_fused.1} parent=23 // pred_region
          %p430 = scmp.lt.s32.totalorder %s36, 7
          %s431 = scalar_select %p430, %s36, 7
          %s432 = smul.addr %s431, 2
          %s433 = scalar_lea.vmem %s6, %s432
        $region44: #{syn_forward_fused.1} parent=23 // pred_fallthru
          _
        // Predicated region
        $region45: #{syn_forward_fused.1} parent=23 // pred_check
          %p434 = pneg %p236
        $region46: #{syn_forward_fused.1} parent=23 // pred_check_branch
          %436 = sbr.rel (%p434) target = $region48
        $region47: #{syn_forward_fused.1} parent=23 // pred_region
          %p437 = scmp.lt.s32.totalorder %s36, 7
          %s438 = scalar_select %p437, %s36, 7
          %p439 = scmp.lt.s32.totalorder %s35, 1
          %s440 = scalar_select %p439, %s35, 1
          %s441 = smul.addr %s438, 2
          %s442 = sadd.s32 %s440, %s441
          %s443 = scalar_lea.vmem %s7, %s442
        $region48: #{syn_forward_fused.1} parent=23 // pred_fallthru
          _
        // Predicated region
        $region49: #{syn_forward_fused.1} parent=23 // pred_check
          %p444 = pneg %p262
        $region50: #{syn_forward_fused.1} parent=23 // pred_check_branch
          %446 = sbr.rel (%p444) target = $region52
        $region51: #{syn_forward_fused.1} parent=23 // pred_region
          %s447 = sand.u32 %s252, 1
          %s448 = scalar_lea.sflag [#allocation5], %s447
          %s449 = sand.u32 %s252, 1
          %s450 = smul.addr %s449, 128
          %s451 = scalar_lea.vmem [#allocation4], %s450
          %s453 = ssub.s32 2048, 2048
          %454 = vsyncadd %s448, %s453
          %s455 = smul.addr %s35, 32
          %s456 = smul.addr %s455, 64
          %s457 = scalar_lea.hbm %s8, %s456
          %s458 = sshll.u32 %s451, 4
          %s459 = int_to_ptr.vmem [resolvable:$true] %s458
          %464 = dma.hbm_to_vmem [thread:$0]  %s457, 2048, %s459, %s448, 64, 64, 4
        $region52: #{syn_forward_fused.1} parent=23 // pred_fallthru
          _
      $region24: #{syn_forward_fused.1} parent=5 // pred_fallthru
        _
      %p465 = scmp.le.s32.totalorder 1, %s28
      %p466 = scmp.lt.s32.totalorder %s28, 17
      %p467 = pnand %p465, %p466
      %p468 = pneg %p467
      // Predicated region
      $region53: #{syn_forward_fused.1} parent=5 // pred_check
        _
      $region54: #{syn_forward_fused.1} parent=5 // pred_check_branch
        %470 = sbr.rel (%p467) target = $region56
      $region55: #{syn_forward_fused.1} parent=5 // pred_region
        %s471 = ssub.s32 %s28, 1
        %s472 = sand.u32 %s255, 1
        %s473 = scalar_lea.sflag [#allocation5], %s472
        %s474 = sand.u32 %s255, 1
        %s475 = smul.addr %s474, 128
        %s476 = scalar_lea.vmem [#allocation4], %s475
        // Predicated region
        $region57: #{syn_forward_fused.1} parent=55 // pred_check
          %p477 = pneg %p268
        $region58: #{syn_forward_fused.1} parent=55 // pred_check_branch
          %479 = sbr.rel (%p477) target = $region60
        $region59: #{syn_forward_fused.1} parent=55 // pred_region
          %480 = dma.done %s473, 2048
        $region60: #{syn_forward_fused.1} parent=55 // pred_fallthru
          _
        %p481 = scmp.lt.s32.totalorder %s37, 1
        %s482 = scalar_select %p481, %s37, 1
        %s483 = scalar_lea.vmem %s0, %s482
        %p484 = pneg %p66
        %p485 = pneg %p63
        %p486 = pneg %p87
        %p487 = pneg %p84
        %p488 = pneg %p108
        %p489 = pneg %p105
        %p490 = scmp.lt.s32.totalorder %s37, 1
        %s491 = scalar_select %p490, %s37, 1
        %s492 = scalar_lea.vmem %s3, %s491
        %p493 = pneg %p134
        %p494 = pneg %p131
        %p495 = scmp.lt.s32.totalorder %s37, 1
        %s496 = scalar_select %p495, %s37, 1
        %s497 = scalar_lea.vmem %s4, %s496
        %p498 = pneg %p160
        %p499 = pneg %p157
        %p500 = scmp.lt.s32.totalorder %s38, 7
        %s501 = scalar_select %p500, %s38, 7
        %p502 = scmp.lt.s32.totalorder %s37, 1
        %s503 = scalar_select %p502, %s37, 1
        %s504 = smul.addr %s501, 2
        %s505 = sadd.s32 %s503, %s504
        %s506 = scalar_lea.vmem %s5, %s505
        %p507 = pneg %p188
        %p508 = pneg %p185
        %p509 = scmp.lt.s32.totalorder %s38, 7
        %s510 = scalar_select %p509, %s38, 7
        %s511 = smul.addr %s510, 2
        %s512 = scalar_lea.vmem %s6, %s511
        %p513 = pneg %p214
        %p514 = pneg %p211
        %p515 = scmp.lt.s32.totalorder %s38, 7
        %s516 = scalar_select %p515, %s38, 7
        %p517 = scmp.lt.s32.totalorder %s37, 1
        %s518 = scalar_select %p517, %s37, 1
        %s519 = smul.addr %s516, 2
        %s520 = sadd.s32 %s518, %s519
        %s521 = scalar_lea.vmem %s7, %s520
        %p522 = pneg %p242
        %p523 = pneg %p239
        %s524 = sand.u32 %s255, 1
        %s525 = scalar_lea.sflag [#allocation5], %s524
        %s526 = sand.u32 %s255, 1
        %s527 = smul.addr %s526, 128
        %s528 = scalar_lea.vmem [#allocation4], %s527
        %p529 = pneg %p268
        %p530 = pneg %p265
        %p531 = pneg %p296
        %p532 = pneg %p293
        %p533 = scmp.lt.s32.totalorder %s38, 7
        %s534 = scalar_select %p533, %s38, 7
        %p535 = scmp.lt.s32.totalorder %s37, 1
        %s536 = scalar_select %p535, %s37, 1
        %s537 = smul.addr %s534, 2
        %s538 = sadd.s32 %s536, %s537
        %s539 = scalar_lea.vmem %s9, %s538
        %p540 = pneg %p322
        %p541 = pneg %p319
        %s542 = sand.u32 %s309, 1
        %s543 = scalar_lea.sflag [#allocation6], %s542
        %s544 = sand.u32 %s309, 1
        %s545 = scalar_lea.vmem [#allocation7], %s544
        %p546 = pneg %p348
        %p547 = pneg %p345
        %s548 = sand.u32 %s33, 1
        %s549 = scalar_lea.sflag [#allocation9], %s548
        %s550 = sand.u32 %s335, 1
        %s551 = scalar_lea.vmem [#allocation8], %s550
        %p552 = pneg %p374
        %p553 = pneg %p371
        %s554 = sand.u32 %s33, 1
        %s555 = scalar_lea.sflag [#allocation9], %s554
        %s556 = sand.u32 %s361, 1
        %s557 = scalar_lea.vmem [#allocation10], %s556
        %p558 = scmp.lt.s32.totalorder %s37, 1
        %s559 = scalar_select %p558, %s37, 1
        %s560 = scalar_lea.vmem %s0, %s559
        %p561 = scmp.lt.s32.totalorder %s37, 1
        %s562 = scalar_select %p561, %s37, 1
        %s563 = scalar_lea.vmem %s3, %s562
        %p564 = scmp.lt.s32.totalorder %s37, 1
        %s565 = scalar_select %p564, %s37, 1
        %s566 = scalar_lea.vmem %s4, %s565
        %p567 = scmp.lt.s32.totalorder %s38, 7
        %s568 = scalar_select %p567, %s38, 7
        %p569 = scmp.lt.s32.totalorder %s37, 1
        %s570 = scalar_select %p569, %s37, 1
        %s571 = smul.addr %s568, 2
        %s572 = sadd.s32 %s570, %s571
        %s573 = scalar_lea.vmem %s5, %s572
        %p574 = scmp.lt.s32.totalorder %s38, 7
        %s575 = scalar_select %p574, %s38, 7
        %s576 = smul.addr %s575, 2
        %s577 = scalar_lea.vmem %s6, %s576
        %p578 = scmp.lt.s32.totalorder %s38, 7
        %s579 = scalar_select %p578, %s38, 7
        %p580 = scmp.lt.s32.totalorder %s37, 1
        %s581 = scalar_select %p580, %s37, 1
        %s582 = smul.addr %s579, 2
        %s583 = sadd.s32 %s581, %s582
        %s584 = scalar_lea.vmem %s7, %s583
        %p585 = scmp.lt.s32.totalorder %s38, 7
        %s586 = scalar_select %p585, %s38, 7
        %p587 = scmp.lt.s32.totalorder %s37, 1
        %s588 = scalar_select %p587, %s37, 1
        %s589 = smul.addr %s586, 2
        %s590 = sadd.s32 %s588, %s589
        %s591 = scalar_lea.vmem %s9, %s590
        %p593 = scmp.eq.s32.totalorder %s38, 0
        // Predicated region
        $region61: #{syn_forward_fused.1} parent=55 // pred_check
          %p594 = pneg %p593
        $region62: #{syn_forward_fused.1} parent=55 // pred_check_branch
          %596 = sbr.rel (%p594) target = $region64
        $region63: #{syn_forward_fused.1} parent=55 // pred_region
          %v597 = vld [vmem:[%s560] sm:$0x1]
          %598 = vst [vmem:[%s545] sm:$0x1] %v597
          %v599 = vld [vmem:[%s563] sm:$0x1]
          %600 = vst [vmem:[%s551] sm:$0x1] %v599
          %v601 = vld [vmem:[%s566] sm:$0x1]
          %602 = vst [vmem:[%s557] sm:$0x1] %v601
          %v603 = vld [vmem:[%s1] sm:$0x3]
          %v604 = vlaneseq
          %vm605 = vcmp.ge.s32.totalorder %v604, 0
          %vm606 = vcmp.lt.s32.totalorder %v604, 256
          %vm607 = vmand %vm605, %vm606
          %608 = vst.msk [vmem:[#allocation2] sm:$0x3] %vm607, %v603
          %v609 = vld [vmem:[%s2] sm:$0x3]
          %610 = vst.msk [vmem:[#allocation3] sm:$0x3] %vm607, %v609
        $region64: #{syn_forward_fused.1} parent=55 // pred_fallthru
          _
        %v611 = vld [vmem:[%s573] sm:$0x1]
        %v612 = vld [vmem:[%s545] sm:$0x1]
        %v613 = vsub.f32 %v611, %v612
        %v614 = vmul.f32 %v613, 0.05
        %v615 = vadd.f32 %v612, %v614
        %v616 = vrcp.pop 1.4142135
        %v617 = vmul.f32 %v615, %v616
        %v618 = vadd.f32 %v617, 0.5
        %619 = vst [vmem:[%s545] sm:$0x1] %v615
        %v620 = vld [vmem:[%s577] sm:$0x3]
        %v621 = vld [vmem:[#allocation2] sm:$0x3]
        %v622 = vld [vmem:[#allocation3] sm:$0x3]
        %v623 = vsub.f32 0.0, %v621
        %v624 = vmul.f32 %v620, 0.5
        %v625 = vadd.f32 %v623, %v624
        %v626 = vmul.f32 %v625, 0.2
        %v627 = vadd.f32 %v621, %v626
        %v628 = vmul.f32 %v622, 0.05
        %v629 = vsub.f32 %v622, %v628
        %v630 = vmul.f32 %v627, 0.1
        %v631 = vadd.f32 %v629, %v630
        %v632 = vlaneseq
        %vm633 = vcmp.ge.s32.totalorder %v632, 0
        %vm634 = vcmp.lt.s32.totalorder %v632, 256
        %vm635 = vmand %vm633, %vm634
        %636 = vst.msk [vmem:[#allocation2] sm:$0x3] %vm635, %v627
        %637 = vst.msk [vmem:[#allocation3] sm:$0x3] %vm635, %v631
        %v638 = vld [vmem:[%s584] sm:$0x1]
        %v639 = vld [vmem:[%s551] sm:$0x1]
        %v640 = vld [vmem:[%s557] sm:$0x1]
        %v641 = vsub.f32 0.0, %v639
        %v642 = vmul.f32 %v638, 0.5
        %v643 = vadd.f32 %v641, %v642
        %v644 = vmul.f32 %v643, 0.2
        %v645 = vadd.f32 %v639, %v644
        %v646 = vmul.f32 %v640, 0.05
        %v647 = vsub.f32 %v640, %v646
        %v648 = vmul.f32 %v645, 0.1
        %v649 = vadd.f32 %v647, %v648
        %650 = vst [vmem:[%s551] sm:$0x1] %v645
        %651 = vst [vmem:[%s557] sm:$0x1] %v649
        %v652 = vld [vmem:[%s476] sm:$0xf]
        %v653 = vld [vmem:[%s476 + $0x4] sm:$0xf]
        %v654 = vld [vmem:[%s476 + $0x8] sm:$0xf]
        %v655 = vld [vmem:[%s476 + $0xc] sm:$0xf]
        %v656 = vld [vmem:[%s476 + $0x10] sm:$0xf]
        %v657 = vld [vmem:[%s476 + $0x14] sm:$0xf]
        %v658 = vld [vmem:[%s476 + $0x18] sm:$0xf]
        %v659 = vld [vmem:[%s476 + $0x1c] sm:$0xf]
        %v660 = vld [vmem:[%s476 + $0x20] sm:$0xf]
        %v661 = vld [vmem:[%s476 + $0x24] sm:$0xf]
        %v662 = vld [vmem:[%s476 + $0x28] sm:$0xf]
        %v663 = vld [vmem:[%s476 + $0x2c] sm:$0xf]
        %v664 = vld [vmem:[%s476 + $0x30] sm:$0xf]
        %v665 = vld [vmem:[%s476 + $0x34] sm:$0xf]
        %v666 = vld [vmem:[%s476 + $0x38] sm:$0xf]
        %v667 = vld [vmem:[%s476 + $0x3c] sm:$0xf]
        %v668 = vld [vmem:[%s476 + $0x40] sm:$0xf]
        %v669 = vld [vmem:[%s476 + $0x44] sm:$0xf]
        %v670 = vld [vmem:[%s476 + $0x48] sm:$0xf]
        %v671 = vld [vmem:[%s476 + $0x4c] sm:$0xf]
        %v672 = vld [vmem:[%s476 + $0x50] sm:$0xf]
        %v673 = vld [vmem:[%s476 + $0x54] sm:$0xf]
        %v674 = vld [vmem:[%s476 + $0x58] sm:$0xf]
        %v675 = vld [vmem:[%s476 + $0x5c] sm:$0xf]
        %v676 = vld [vmem:[%s476 + $0x60] sm:$0xf]
        %v677 = vld [vmem:[%s476 + $0x64] sm:$0xf]
        %v678 = vld [vmem:[%s476 + $0x68] sm:$0xf]
        %v679 = vld [vmem:[%s476 + $0x6c] sm:$0xf]
        %v680 = vld [vmem:[%s476 + $0x70] sm:$0xf]
        %v681 = vld [vmem:[%s476 + $0x74] sm:$0xf]
        %v682 = vld [vmem:[%s476 + $0x78] sm:$0xf]
        %v683 = vld [vmem:[%s476 + $0x7c] sm:$0xf]
        %v685 = vlaneseq
        %v686 = vshrl.u32 %v685, 7
        %v687 = vsub.s32 0, %v686
        %v688 = vrot.slane %v631, %v687
        %v689 = vlaneseq
        %v690 = vshrl.u32 %v689, 7
        %v691 = vsub.s32 1, %v690
        %v692 = vrot.slane %v631, %v691
        %v695 = vpack.c.bf16 %v688, %v688
        %v696 = vpack.c.bf16 %v692, %v692
        %v697 = vunpack.c.l.bf16 %v695
        %v698 = vunpack.c.l.bf16 %v696
        %v701 = vcombine.low %v697, %v698
        %v703 = vunpack.c.l.s4 1966171168
        %v704 = vunpack.c.0.s8 %v703
        %v705 = vlaneseq
        %v706 = vshrl.u32 %v705, 7
        %v707 = vsub.s32 %v704, %v706
        %v708 = vrot.slane %v701, %v707
        %v710 = vunpack.c.l.s4 1966171168
        %v711 = vunpack.c.0.s8 %v710
        %v712 = vlaneseq
        %v713 = vshrl.u32 %v712, 7
        %v714 = vsub.s32 %v711, %v713
        %v715 = vrot.slane %v708, %v714
        %v717 = vsub.f32 %v631, %v715
        %v719 = vlaneseq
        %v720 = vshrl.u32 %v719, 7
        %v721 = vsub.s32 0, %v720
        %v722 = vrot.slane %v717, %v721
        %v723 = vlaneseq
        %v724 = vshrl.u32 %v723, 7
        %v725 = vsub.s32 1, %v724
        %v726 = vrot.slane %v717, %v725
        %v729 = vpack.c.bf16 %v722, %v722
        %v730 = vpack.c.bf16 %v726, %v726
        %v763 = vunpack.c.l.b16 %v652
        %v764 = vunpack.c.l.b16 %v653
        %v765 = vunpack.c.l.b16 %v654
        %v766 = vunpack.c.l.b16 %v655
        %v767 = vunpack.c.l.b16 %v656
        %v768 = vunpack.c.l.b16 %v657
        %v769 = vunpack.c.l.b16 %v658
        %v770 = vunpack.c.l.b16 %v659
        %v771 = vunpack.c.l.b16 %v660
        %v772 = vunpack.c.l.b16 %v661
        %v773 = vunpack.c.l.b16 %v662
        %v774 = vunpack.c.l.b16 %v663
        %v775 = vunpack.c.l.b16 %v664
        %v776 = vunpack.c.l.b16 %v665
        %v777 = vunpack.c.l.b16 %v666
        %v778 = vunpack.c.l.b16 %v667
        %v779 = vunpack.c.l.b16 %v668
        %v780 = vunpack.c.l.b16 %v669
        %v781 = vunpack.c.l.b16 %v670
        %v782 = vunpack.c.l.b16 %v671
        %v783 = vunpack.c.l.b16 %v672
        %v784 = vunpack.c.l.b16 %v673
        %v785 = vunpack.c.l.b16 %v674
        %v786 = vunpack.c.l.b16 %v675
        %v787 = vunpack.c.l.b16 %v676
        %v788 = vunpack.c.l.b16 %v677
        %v789 = vunpack.c.l.b16 %v678
        %v790 = vunpack.c.l.b16 %v679
        %v791 = vunpack.c.l.b16 %v680
        %v792 = vunpack.c.l.b16 %v681
        %v793 = vunpack.c.l.b16 %v682
        %v794 = vunpack.c.l.b16 %v683
        %v795 = vpack.c.b16 %v764, %v763
        %v796 = vpack.c.b16 %v766, %v765
        %v797 = vpack.c.b16 %v768, %v767
        %v798 = vpack.c.b16 %v770, %v769
        %v799 = vpack.c.b16 %v772, %v771
        %v800 = vpack.c.b16 %v774, %v773
        %v801 = vpack.c.b16 %v776, %v775
        %v802 = vpack.c.b16 %v778, %v777
        %v803 = vpack.c.b16 %v780, %v779
        %v804 = vpack.c.b16 %v782, %v781
        %v805 = vpack.c.b16 %v784, %v783
        %v806 = vpack.c.b16 %v786, %v785
        %v807 = vpack.c.b16 %v788, %v787
        %v808 = vpack.c.b16 %v790, %v789
        %v809 = vpack.c.b16 %v792, %v791
        %v810 = vpack.c.b16 %v794, %v793
        %827 = vmatprep.subr.bf16.mxu0 0
        %828 = vmatpush1.bf16.msra.mxu0 %v795
        %829 = vmatprep.subr.bf16.mxu0 0
        %830 = vmatpush1.bf16.msra.mxu0 %v796
        %831 = vmatprep.subr.bf16.mxu0 0
        %832 = vmatpush1.bf16.msra.mxu0 %v797
        %833 = vmatprep.subr.bf16.mxu0 0
        %834 = vmatpush1.bf16.msra.mxu0 %v798
        %835 = vmatprep.subr.bf16.mxu0 0
        %836 = vmatpush1.bf16.msra.mxu0 %v799
        %837 = vmatprep.subr.bf16.mxu0 0
        %838 = vmatpush1.bf16.msra.mxu0 %v800
        %839 = vmatprep.subr.bf16.mxu0 0
        %840 = vmatpush1.bf16.msra.mxu0 %v801
        %841 = vmatprep.subr.bf16.mxu0 0
        %842 = vmatpush1.bf16.msra.mxu0 %v802
        %843 = vmatprep.subr.bf16.mxu0 0
        %844 = vmatpush1.bf16.msra.mxu0 %v803
        %845 = vmatprep.subr.bf16.mxu0 0
        %846 = vmatpush1.bf16.msra.mxu0 %v804
        %847 = vmatprep.subr.bf16.mxu0 0
        %848 = vmatpush1.bf16.msra.mxu0 %v805
        %849 = vmatprep.subr.bf16.mxu0 0
        %850 = vmatpush1.bf16.msra.mxu0 %v806
        %851 = vmatprep.subr.bf16.mxu0 0
        %852 = vmatpush1.bf16.msra.mxu0 %v807
        %853 = vmatprep.subr.bf16.mxu0 0
        %854 = vmatpush1.bf16.msra.mxu0 %v808
        %855 = vmatprep.subr.bf16.mxu0 0
        %856 = vmatpush1.bf16.msra.mxu0 %v809
        %857 = vmatprep.subr.bf16.mxu0 0
        %858 = vmatpush1.bf16.msra.mxu0 %v810
        %859 = vmatprep.mubr.bf16.mxu0 %v730
        %860 = vmatmul.mubr.bf16.gmra.mrb[0].mxu0 %v729
        %v861 = vpop.f32.mrb[0].mxu0
        %v862 = vadd.f32 0.0, %v861
        %v863 = vpop.f32.mrb[0].mxu0
        %v864 = vpop.f32.mrb[0].mxu0
        %v865 = vpop.f32.mrb[0].mxu0
        %866 = vdwg.mxu0
        %867 = vmatprep.subr.bf16.mxu0 0
        %868 = vmatpush1.bf16.msra.mxu0 %v795
        %869 = vmatprep.subr.bf16.mxu0 0
        %870 = vmatpush1.bf16.msra.mxu0 %v796
        %871 = vmatprep.subr.bf16.mxu0 0
        %872 = vmatpush1.bf16.msra.mxu0 %v797
        %873 = vmatprep.subr.bf16.mxu0 0
        %874 = vmatpush1.bf16.msra.mxu0 %v798
        %875 = vmatprep.subr.bf16.mxu0 0
        %876 = vmatpush1.bf16.msra.mxu0 %v799
        %877 = vmatprep.subr.bf16.mxu0 0
        %878 = vmatpush1.bf16.msra.mxu0 %v800
        %879 = vmatprep.subr.bf16.mxu0 0
        %880 = vmatpush1.bf16.msra.mxu0 %v801
        %881 = vmatprep.subr.bf16.mxu0 0
        %882 = vmatpush1.bf16.msra.mxu0 %v802
        %883 = vmatprep.subr.bf16.mxu0 0
        %884 = vmatpush1.bf16.msra.mxu0 %v803
        %885 = vmatprep.subr.bf16.mxu0 0
        %886 = vmatpush1.bf16.msra.mxu0 %v804
        %887 = vmatprep.subr.bf16.mxu0 0
        %888 = vmatpush1.bf16.msra.mxu0 %v805
        %889 = vmatprep.subr.bf16.mxu0 0
        %890 = vmatpush1.bf16.msra.mxu0 %v806
        %891 = vmatprep.subr.bf16.mxu0 0
        %892 = vmatpush1.bf16.msra.mxu0 %v807
        %893 = vmatprep.subr.bf16.mxu0 0
        %894 = vmatpush1.bf16.msra.mxu0 %v808
        %895 = vmatprep.subr.bf16.mxu0 0
        %896 = vmatpush1.bf16.msra.mxu0 %v809
        %897 = vmatprep.subr.bf16.mxu0 0
        %898 = vmatpush1.bf16.msra.mxu0 %v810
        %899 = vmatprep.mubr.bf16.mxu0 %v696
        %900 = vmatmul.mubr.bf16.gmra.mrb[0].mxu0 %v695
        %v901 = vpop.f32.mrb[0].mxu0
        %v902 = vadd.f32 %v862, %v901
        %v903 = vpop.f32.mrb[0].mxu0
        %v904 = vpop.f32.mrb[0].mxu0
        %v905 = vpop.f32.mrb[0].mxu0
        %906 = vdwg.mxu0
        %v907 = vadd.f32 %v902, %v618
        %908 = vst [vmem:[%s591] sm:$0x1] %v907
        %p909 = scmp.lt.s32.totalorder %s38, 7
        %s910 = scalar_select %p909, %s38, 7
        %p911 = scmp.lt.s32.totalorder %s37, 1
        %s912 = scalar_select %p911, %s37, 1
        %s913 = smul.addr %s910, 2
        %s914 = sadd.s32 %s912, %s913
        %s915 = scalar_lea.vmem %s9, %s914
        %s916 = sand.u32 %s309, 1
        %s917 = scalar_lea.sflag [#allocation6], %s916
        %s918 = sand.u32 %s309, 1
        %s919 = scalar_lea.vmem [#allocation7], %s918
        %s920 = sand.u32 %s33, 1
        %s921 = scalar_lea.sflag [#allocation9], %s920
        %s922 = sand.u32 %s335, 1
        %s923 = scalar_lea.vmem [#allocation8], %s922
        %s924 = sand.u32 %s33, 1
        %s925 = scalar_lea.sflag [#allocation9], %s924
        %s926 = sand.u32 %s361, 1
        %s927 = scalar_lea.vmem [#allocation10], %s926
        // Predicated region
        $region65: #{syn_forward_fused.1} parent=55 // pred_check
          %p928 = pneg %p293
        $region66: #{syn_forward_fused.1} parent=55 // pred_check_branch
          %930 = sbr.rel (%p928) target = $region68
        $region67: #{syn_forward_fused.1} parent=55 // pred_region
          _
        $region68: #{syn_forward_fused.1} parent=55 // pred_fallthru
          _
        // Predicated region
        $region69: #{syn_forward_fused.1} parent=55 // pred_check
          %p931 = pneg %p319
        $region70: #{syn_forward_fused.1} parent=55 // pred_check_branch
          %933 = sbr.rel (%p931) target = $region72
        $region71: #{syn_forward_fused.1} parent=55 // pred_region
          %s935 = ssub.s32 16, 16
          %936 = vsyncadd %s917, %s935
          %s937 = smul.addr %s37, 16
          %s938 = scalar_lea.hbm %s10, %s937
          %s940 = sshll.u32 %s919, 4
          %s941 = int_to_ptr.vmem [resolvable:$true] %s940
          %943 = dma.vmem_to_hbm [thread:$0]  %s941, 16, %s938, %s917
        $region72: #{syn_forward_fused.1} parent=55 // pred_fallthru
          _
        // Predicated region
        $region73: #{syn_forward_fused.1} parent=55 // pred_check
          %p944 = pneg %p345
        $region74: #{syn_forward_fused.1} parent=55 // pred_check_branch
          %946 = sbr.rel (%p944) target = $region76
        $region75: #{syn_forward_fused.1} parent=55 // pred_region
          %s948 = ssub.s32 16, 16
          %949 = vsyncadd %s921, %s948
          %s950 = smul.addr %s37, 16
          %s951 = scalar_lea.hbm %s11, %s950
          %s953 = sshll.u32 %s923, 4
          %s954 = int_to_ptr.vmem [resolvable:$true] %s953
          %956 = dma.vmem_to_hbm [thread:$0]  %s954, 16, %s951, %s921
        $region76: #{syn_forward_fused.1} parent=55 // pred_fallthru
          _
        // Predicated region
        $region77: #{syn_forward_fused.1} parent=55 // pred_check
          %p957 = pneg %p371
        $region78: #{syn_forward_fused.1} parent=55 // pred_check_branch
          %959 = sbr.rel (%p957) target = $region80
        $region79: #{syn_forward_fused.1} parent=55 // pred_region
          %s961 = ssub.s32 16, 16
          %962 = vsyncadd %s925, %s961
          %s963 = smul.addr %s37, 16
          %s964 = scalar_lea.hbm %s12, %s963
          %s966 = sshll.u32 %s927, 4
          %s967 = int_to_ptr.vmem [resolvable:$true] %s966
          %969 = dma.vmem_to_hbm [thread:$0]  %s967, 16, %s964, %s925
        $region80: #{syn_forward_fused.1} parent=55 // pred_fallthru
          _
      $region56: #{syn_forward_fused.1} parent=5 // pred_fallthru
        _
      %p970 = scmp.le.s32.totalorder 2, %s28
      // Predicated region
      $region81: #{syn_forward_fused.1} parent=5 // pred_check
        %p971 = pneg %p970
      $region82: #{syn_forward_fused.1} parent=5 // pred_check_branch
        %973 = sbr.rel (%p971) target = $region84
      $region83: #{syn_forward_fused.1} parent=5 // pred_region
        %s974 = ssub.s32 %s28, 2
        // Predicated region
        $region85: #{syn_forward_fused.1} parent=83 // pred_check
          %p975 = pneg %p299
        $region86: #{syn_forward_fused.1} parent=83 // pred_check_branch
          %977 = sbr.rel (%p975) target = $region88
        $region87: #{syn_forward_fused.1} parent=83 // pred_region
          %p978 = scmp.lt.s32.totalorder %s40, 7
          %s979 = scalar_select %p978, %s40, 7
          %p980 = scmp.lt.s32.totalorder %s39, 1
          %s981 = scalar_select %p980, %s39, 1
          %s982 = smul.addr %s979, 2
          %s983 = sadd.s32 %s981, %s982
          %s984 = scalar_lea.vmem %s9, %s983
        $region88: #{syn_forward_fused.1} parent=83 // pred_fallthru
          _
        // Predicated region
        $region89: #{syn_forward_fused.1} parent=83 // pred_check
          %p985 = pneg %p325
        $region90: #{syn_forward_fused.1} parent=83 // pred_check_branch
          %987 = sbr.rel (%p985) target = $region92
        $region91: #{syn_forward_fused.1} parent=83 // pred_region
          %s988 = sand.u32 %s310, 1
          %s989 = scalar_lea.sflag [#allocation6], %s988
          %s990 = sand.u32 %s310, 1
          %s991 = scalar_lea.vmem [#allocation7], %s990
          %992 = dma.done %s989, 16
        $region92: #{syn_forward_fused.1} parent=83 // pred_fallthru
          _
        // Predicated region
        $region93: #{syn_forward_fused.1} parent=83 // pred_check
          %p993 = pneg %p351
        $region94: #{syn_forward_fused.1} parent=83 // pred_check_branch
          %995 = sbr.rel (%p993) target = $region96
        $region95: #{syn_forward_fused.1} parent=83 // pred_region
          %s996 = sand.u32 %s34, 1
          %s997 = scalar_lea.sflag [#allocation9], %s996
          %s998 = sand.u32 %s336, 1
          %s999 = scalar_lea.vmem [#allocation8], %s998
          %1000 = dma.done %s997, 16
        $region96: #{syn_forward_fused.1} parent=83 // pred_fallthru
          _
        // Predicated region
        $region97: #{syn_forward_fused.1} parent=83 // pred_check
          %p1001 = pneg %p377
        $region98: #{syn_forward_fused.1} parent=83 // pred_check_branch
          %1003 = sbr.rel (%p1001) target = $region100
        $region99: #{syn_forward_fused.1} parent=83 // pred_region
          %s1004 = sand.u32 %s34, 1
          %s1005 = scalar_lea.sflag [#allocation9], %s1004
          %s1006 = sand.u32 %s362, 1
          %s1007 = scalar_lea.vmem [#allocation10], %s1006
          %1008 = dma.done %s1005, 16
        $region100: #{syn_forward_fused.1} parent=83 // pred_fallthru
          _
      $region84: #{syn_forward_fused.1} parent=5 // pred_fallthru
        _
    $region6: #{syn_forward_fused.1} parent=1 // loop_footer
      %s32 = sadd.s32 1, %s28
    $region7: #{syn_forward_fused.1} parent=1 // loop_footer_branch
      %27 = sbr.rel target = $region3
    $region8: #{syn_forward_fused.1} parent=1 // loop_exit
      _
    %1009 = vsyncpa [#allocation5], 1
    %s1010 = scalar_lea.sflag [#allocation5], 1
    %1011 = vsyncpa %s1010, 1
    %1012 = vsyncpa [#allocation6], 1
    %s1013 = scalar_lea.sflag [#allocation6], 1
    %1014 = vsyncpa %s1013, 1
    %1015 = vsyncpa [#allocation9], 1
    %s1016 = scalar_lea.sflag [#allocation9], 1
    %1017 = vsyncpa %s1016, 1

</llo_original>
